<compile_context>
chip_gen: v6e
topology: v6e:2x2x1
jax: 0.10.0
libtpu: 0.0.40
codegen_flags: <defaults>
</compile_context>

<pallas_src>
import math

import jax
import jax.numpy as jnp
from jax import lax
from jax.experimental import pallas as pl
from jax.experimental.pallas import tpu as pltpu

# ---------------- model dims (small, consistent with the module) -------------
B = 2          # batch
S = 8          # sequence length
D = 32         # d_model
H = 4          # nhead
HD = D // H    # head_dim
F = 64         # dim_feedforward
BS = B * S     # flattened token count
EPS = 1e-5     # nn.LayerNorm default eps

# ---------------- weight-slab row layout (all blocks are 32 columns) ---------
R_WQK = 0                    # 2D rows : [wq * 1/sqrt(HD) ; wk]
R_WV = R_WQK + 2 * D         # D rows  : wv
R_WO = R_WV + D              # D rows  : wo
R_W1 = R_WO + D              # F rows  : w1
R_W2T = R_W1 + F             # F rows  : w2.T
R_QMASK = R_W2T + F          # H*BS rows: 0/1 head-column mask
R_VECD = R_QMASK + H * BS    # 7 rows  : bv, bo, b2, ln1_g, ln1_b, ln2_g, ln2_b
SLAB_ROWS = ((R_VECD + 7 + 7) // 8) * 8   # pad rows to a multiple of 8

_DN_T = (((1,), (1,)), ((), ()))   # x @ W.T  (contract the shared last dims)
_DN_N = (((1,), (0,)), ((), ()))   # x @ W    (standard matmul)


def _layer_norm(x, gamma, beta):
    m = jnp.mean(x, axis=-1, keepdims=True)
    c = x - m
    v = jnp.mean(c * c, axis=-1, keepdims=True)
    return c * lax.rsqrt(v + EPS) * gamma + beta


def transformer_layer_kernel(x_ref, slab_ref, vec64_ref, bias_ref, out_ref):
    src = x_ref[0:BS, :]                          # (BS, D)
    qk_in = src + x_ref[BS:2 * BS, :]             # with_pos_embed

    vec64 = vec64_ref[...]                        # (2, 2D): [bq_s||bk], b1

    # --- fused Q/K projection (wq/bq pre-scaled by 1/sqrt(HD)) + V projection
    qk = lax.dot_general(qk_in, slab_ref[R_WQK:R_WQK + 2 * D, :], _DN_T,
                         preferred_element_type=jnp.float32) + vec64[0:1, :]
    q = qk[:, :D]
    k = qk[:, D:]
    v = lax.dot_general(src, slab_ref[R_WV:R_WV + D, :], _DN_T,
                        preferred_element_type=jnp.float32) \
        + slab_ref[R_VECD:R_VECD + 1, :]

    # --- block-diagonal all-head scores in ONE matmul -------------------------
    qmask = slab_ref[R_QMASK:R_QMASK + H * BS, :]                 # (H*BS, D) 0/1
    q_blk = jnp.concatenate([q, q, q, q], axis=0) * qmask         # (H*BS, D)
    s = lax.dot_general(q_blk, k, _DN_T,
                        preferred_element_type=jnp.float32)       # (H*BS, BS)
    s = s + bias_ref[...]                                         # batch mask

    # --- ONE softmax pass for all heads ---------------------------------------
    s = s - jnp.max(s, axis=-1, keepdims=True)
    p = jnp.exp(s)
    p = p * pl.reciprocal(jnp.sum(p, axis=-1, keepdims=True), approx=False)

    # --- ONE P@V matmul; head selection via mask; merge head blocks -----------
    pv = lax.dot_general(p, v, _DN_N,
                         preferred_element_type=jnp.float32)      # (H*BS, D)
    pv = pv * qmask
    attn = (pv[0:BS, :] + pv[BS:2 * BS, :]
            + pv[2 * BS:3 * BS, :] + pv[3 * BS:4 * BS, :])        # (BS, D)

    # --- single output projection + bo ----------------------------------------
    attn = lax.dot_general(attn, slab_ref[R_WO:R_WO + D, :], _DN_T,
                           preferred_element_type=jnp.float32) \
        + slab_ref[R_VECD + 1:R_VECD + 2, :]

    # --- residual + norm1 (normalize_before=False => post-norm) ---------------
    x = _layer_norm(src + attn,
                    slab_ref[R_VECD + 3:R_VECD + 4, :],
                    slab_ref[R_VECD + 4:R_VECD + 5, :])

    # --- feed-forward: linear2(relu(linear1(x))) ------------------------------
    h1 = lax.dot_general(x, slab_ref[R_W1:R_W1 + F, :], _DN_T,
                         preferred_element_type=jnp.float32) + vec64[1:2, :]
    h1 = jnp.maximum(h1, 0.0)                     # activation='relu'
    ff = lax.dot_general(h1, slab_ref[R_W2T:R_W2T + F, :], _DN_N,
                         preferred_element_type=jnp.float32) \
        + slab_ref[R_VECD + 2:R_VECD + 3, :]

    # --- residual + norm2 ------------------------------------------------------
    y = _layer_norm(x + ff,
                    slab_ref[R_VECD + 5:R_VECD + 6, :],
                    slab_ref[R_VECD + 6:R_VECD + 7, :])
    out_ref[...] = y.astype(out_ref.dtype)


def pack_params(params):
    """One-time packing of PyTorch-style parameters (NOT in the hot path)."""
    (wq, wk, wv, bq, bk, bv, wo, bo, w1, b1, w2, b2,
     ln1_g, ln1_b, ln2_g, ln2_b) = params
    scale = 1.0 / math.sqrt(HD)

    wqk = jnp.concatenate([wq * scale, wk], axis=0)               # (2D, D)
    qmask = jnp.repeat(jnp.eye(H, dtype=jnp.float32), HD, axis=1)  # (H, D)
    qmask = jnp.repeat(qmask, BS, axis=0)                          # (H*BS, D)
    vecd = jnp.concatenate([bv, bo, b2, ln1_g, ln1_b, ln2_g, ln2_b], axis=0)
    pad = jnp.zeros((SLAB_ROWS - (R_VECD + 7), D), jnp.float32)
    slab = jnp.concatenate([wqk, wv, wo, w1, w2.T, qmask, vecd, pad], axis=0)

    vec64 = jnp.concatenate(
        [jnp.concatenate([bq * scale, bk], axis=1), b1], axis=0)   # (2, 2D)

    # Block-diagonal (finite) batch bias for the flattened tokens, tiled per head.
    rb = jnp.arange(BS)[:, None] // S
    cb = jnp.arange(BS)[None, :] // S
    bias = jnp.where(rb == cb, 0.0, -1e9).astype(jnp.float32)      # (BS, BS)
    bias = jnp.tile(bias, (H, 1))                                  # (H*BS, BS)
    return slab, vec64, bias


@jax.jit
def transformer_layer(src, pos, slab, vec64, bias):
    x_in = jnp.concatenate([src.reshape(BS, D), pos.reshape(BS, D)], axis=0)
    vmem = pl.BlockSpec(memory_space=pltpu.MemorySpace.VMEM)
    out_flat = pl.pallas_call(
        transformer_layer_kernel,
        out_shape=jax.ShapeDtypeStruct((BS, D), src.dtype),
        in_specs=[vmem] * 4,
        out_specs=vmem,
    )(x_in, slab, vec64, bias)
    return out_flat.reshape(B, S, D)


# ----------------------- pure-JAX reference (for sanity) ---------------------
def reference(src, pos, params):
    (wq, wk, wv, bq, bk, bv, wo, bo, w1, b1, w2, b2,
     ln1_g, ln1_b, ln2_g, ln2_b) = params
    qk_in = src + pos
    q = qk_in @ wq.T + bq[0]
    k = qk_in @ wk.T + bk[0]
    v = src @ wv.T + bv[0]
    qh = q.reshape(B, S, H, HD).transpose(0, 2, 1, 3)
    kh = k.reshape(B, S, H, HD).transpose(0, 2, 1, 3)
    vh = v.reshape(B, S, H, HD).transpose(0, 2, 1, 3)
    s = jnp.einsum("bhqd,bhkd->bhqk", qh, kh) / math.sqrt(HD)
    p = jax.nn.softmax(s, axis=-1)
    a = jnp.einsum("bhqk,bhkd->bhqd", p, vh).transpose(0, 2, 1, 3).reshape(B, S, D)
    a = a @ wo.T + bo[0]
    x = src + a
    x = (x - x.mean(-1, keepdims=True)) / jnp.sqrt(x.var(-1, keepdims=True) + EPS)
    x = x * ln1_g[0] + ln1_b[0]
    ff = jnp.maximum(x @ w1.T + b1[0], 0.0) @ w2.T + b2[0]
    y = x + ff
    y = (y - y.mean(-1, keepdims=True)) / jnp.sqrt(y.var(-1, keepdims=True) + EPS)
    return y * ln2_g[0] + ln2_b[0]


if __name__ == "__main__":
    key = jax.random.PRNGKey(0)
    keys = jax.random.split(key, 16)

    def u(k, shape, fan_in):
        bound = 1.0 / math.sqrt(fan_in)
        return jax.random.uniform(k, shape, jnp.float32, -bound, bound)

    src = jax.random.normal(keys[0], (B, S, D), jnp.float32)
    pos = jax.random.normal(keys[1], (B, S, D), jnp.float32)

    # Deterministic synthetic parameters (PyTorch-style shapes, [out, in]).
    wq = u(keys[2], (D, D), D); wk = u(keys[3], (D, D), D); wv = u(keys[4], (D, D), D)
    bq = u(keys[5], (1, D), D); bk = u(keys[6], (1, D), D); bv = u(keys[7], (1, D), D)
    wo = u(keys[8], (D, D), D); bo = u(keys[9], (1, D), D)
    w1 = u(keys[10], (F, D), D); b1 = u(keys[11], (1, F), D)
    w2 = u(keys[12], (D, F), F); b2 = u(keys[13], (1, D), F)
    ln1_g = jnp.ones((1, D), jnp.float32); ln1_b = jnp.zeros((1, D), jnp.float32)
    ln2_g = jnp.ones((1, D), jnp.float32); ln2_b = jnp.zeros((1, D), jnp.float32)

    params = (wq, wk, wv, bq, bk, bv, wo, bo, w1, b1, w2, b2,
              ln1_g, ln1_b, ln2_g, ln2_b)

    # One-time packing (NOT per call); the hot path is a single jitted call
    # that dispatches one fused concat + the Pallas custom call.
    slab, vec64, bias = jax.block_until_ready(pack_params(params))

    out = transformer_layer(src, pos, slab, vec64, bias)
    out = jax.block_until_ready(out)

    ref = reference(src, pos, params)
    assert out.shape == (B, S, D)
    err = jnp.max(jnp.abs(out - ref))
    # Exact softmax reciprocal restores tight numerics.
    assert jnp.allclose(out, ref, atol=1e-4, rtol=1e-4), f"max abs err {err}"

    print("KERNEL_OK")
</pallas_src>

<mosaic_0001>
module attributes {stable_mosaic.version = 11 : i64} {
  func.func @transformer_layer_kernel(%arg0: memref<32x32xf32, #tpu.memory_space<vmem>>, %arg1: memref<328x32xf32, #tpu.memory_space<vmem>>, %arg2: memref<2x64xf32, #tpu.memory_space<vmem>>, %arg3: memref<64x16xf32, #tpu.memory_space<vmem>>, %arg4: memref<16x32xf32, #tpu.memory_space<vmem>>) attributes {dimension_semantics = [], scalar_prefetch = 0 : i64, scratch_operands = 0 : i64, tpu.core_type = #tpu.core_type<tc>} {
    %c0 = arith.constant 0 : index
    %c0_0 = arith.constant 0 : index
    %0 = vector.load %arg0[%c0, %c0_0] : memref<32x32xf32, #tpu.memory_space<vmem>>, vector<16x32xf32>
    %c16 = arith.constant 16 : index
    %c0_1 = arith.constant 0 : index
    %1 = vector.load %arg0[%c16, %c0_1] : memref<32x32xf32, #tpu.memory_space<vmem>>, vector<16x32xf32>
    %2 = arith.addf %0, %1 : vector<16x32xf32>
    %c0_2 = arith.constant 0 : index
    %c0_3 = arith.constant 0 : index
    %3 = vector.load %arg2[%c0_2, %c0_3] : memref<2x64xf32, #tpu.memory_space<vmem>>, vector<2x64xf32>
    %c0_4 = arith.constant 0 : index
    %c0_5 = arith.constant 0 : index
    %4 = vector.load %arg1[%c0_4, %c0_5] : memref<328x32xf32, #tpu.memory_space<vmem>>, vector<64x32xf32>
    %cst = arith.constant dense<0.000000e+00> : vector<16x64xf32>
    %5 = tpu.matmul %2, %4, %cst {dimension_numbers = #tpu.dot_dimension_numbers<[1], [1], [0], [0], [0, 0, 1, 0], [], []>} : vector<16x32xf32>, vector<64x32xf32>, vector<16x64xf32> -> vector<16x64xf32>
    %6 = vector.extract_strided_slice %3 {offsets = [0, 0], sizes = [1, 64], strides = [1, 1]} : vector<2x64xf32> to vector<1x64xf32>
    %7 = vector.broadcast %6 : vector<1x64xf32> to vector<16x64xf32>
    %8 = arith.addf %5, %7 : vector<16x64xf32>
    %9 = vector.extract_strided_slice %8 {offsets = [0, 0], sizes = [16, 32], strides = [1, 1]} : vector<16x64xf32> to vector<16x32xf32>
    %10 = vector.extract_strided_slice %8 {offsets = [0, 32], sizes = [16, 32], strides = [1, 1]} : vector<16x64xf32> to vector<16x32xf32>
    %c64 = arith.constant 64 : index
    %c0_6 = arith.constant 0 : index
    %11 = vector.load %arg1[%c64, %c0_6] : memref<328x32xf32, #tpu.memory_space<vmem>>, vector<32x32xf32>
    %cst_7 = arith.constant dense<0.000000e+00> : vector<16x32xf32>
    %12 = tpu.matmul %0, %11, %cst_7 {dimension_numbers = #tpu.dot_dimension_numbers<[1], [1], [0], [0], [0, 0, 1, 0], [], []>} : vector<16x32xf32>, vector<32x32xf32>, vector<16x32xf32> -> vector<16x32xf32>
    %c320 = arith.constant 320 : index
    %c0_8 = arith.constant 0 : index
    %13 = vector.load %arg1[%c320, %c0_8] : memref<328x32xf32, #tpu.memory_space<vmem>>, vector<1x32xf32>
    %14 = vector.broadcast %13 : vector<1x32xf32> to vector<16x32xf32>
    %15 = arith.addf %12, %14 : vector<16x32xf32>
    %c256 = arith.constant 256 : index
    %c0_9 = arith.constant 0 : index
    %16 = vector.load %arg1[%c256, %c0_9] : memref<328x32xf32, #tpu.memory_space<vmem>>, vector<64x32xf32>
    %17 = tpu.concatenate %9, %9, %9, %9 in 0 : vector<16x32xf32>, vector<16x32xf32>, vector<16x32xf32>, vector<16x32xf32> -> vector<64x32xf32>
    %18 = arith.mulf %17, %16 : vector<64x32xf32>
    %cst_10 = arith.constant dense<0.000000e+00> : vector<64x16xf32>
    %19 = tpu.matmul %18, %10, %cst_10 {dimension_numbers = #tpu.dot_dimension_numbers<[1], [1], [0], [0], [0, 0, 1, 0], [], []>} : vector<64x32xf32>, vector<16x32xf32>, vector<64x16xf32> -> vector<64x16xf32>
    %c0_11 = arith.constant 0 : index
    %c0_12 = arith.constant 0 : index
    %20 = vector.load %arg3[%c0_11, %c0_12] : memref<64x16xf32, #tpu.memory_space<vmem>>, vector<64x16xf32>
    %21 = arith.addf %19, %20 : vector<64x16xf32>
    %cst_13 = arith.constant dense<0xFF800000> : vector<64xf32>
    %22 = vector.multi_reduction <maximumf>, %21, %cst_13 [1] : vector<64x16xf32> to vector<64xf32>
    %23 = vector.shape_cast %22 : vector<64xf32> to vector<64x1xf32>
    %24 = vector.broadcast %23 : vector<64x1xf32> to vector<64x16xf32>
    %25 = arith.subf %21, %24 : vector<64x16xf32>
    %26 = math.exp %25 : vector<64x16xf32>
    %cst_14 = arith.constant dense<0.000000e+00> : vector<64xf32>
    %27 = vector.multi_reduction <add>, %26, %cst_14 [1] : vector<64x16xf32> to vector<64xf32>
    %28 = vector.shape_cast %27 : vector<64xf32> to vector<64x1xf32>
    %29 = tpu.reciprocal %28 : vector<64x1xf32> -> vector<64x1xf32>
    %30 = vector.broadcast %29 : vector<64x1xf32> to vector<64x16xf32>
    %31 = arith.mulf %26, %30 : vector<64x16xf32>
    %cst_15 = arith.constant dense<0.000000e+00> : vector<64x32xf32>
    %32 = tpu.matmul %31, %15, %cst_15 {dimension_numbers = #tpu.dot_dimension_numbers<[1], [0], [0], [1], [0, 0, 1, 1], [], []>} : vector<64x16xf32>, vector<16x32xf32>, vector<64x32xf32> -> vector<64x32xf32>
    %33 = arith.mulf %32, %16 : vector<64x32xf32>
    %34 = vector.extract_strided_slice %33 {offsets = [0, 0], sizes = [16, 32], strides = [1, 1]} : vector<64x32xf32> to vector<16x32xf32>
    %35 = vector.extract_strided_slice %33 {offsets = [16, 0], sizes = [16, 32], strides = [1, 1]} : vector<64x32xf32> to vector<16x32xf32>
    %36 = arith.addf %34, %35 : vector<16x32xf32>
    %37 = vector.extract_strided_slice %33 {offsets = [32, 0], sizes = [16, 32], strides = [1, 1]} : vector<64x32xf32> to vector<16x32xf32>
    %38 = arith.addf %36, %37 : vector<16x32xf32>
    %39 = vector.extract_strided_slice %33 {offsets = [48, 0], sizes = [16, 32], strides = [1, 1]} : vector<64x32xf32> to vector<16x32xf32>
    %40 = arith.addf %38, %39 : vector<16x32xf32>
    %c96 = arith.constant 96 : index
    %c0_16 = arith.constant 0 : index
    %41 = vector.load %arg1[%c96, %c0_16] : memref<328x32xf32, #tpu.memory_space<vmem>>, vector<32x32xf32>
    %cst_17 = arith.constant dense<0.000000e+00> : vector<16x32xf32>
    %42 = tpu.matmul %40, %41, %cst_17 {dimension_numbers = #tpu.dot_dimension_numbers<[1], [1], [0], [0], [0, 0, 1, 0], [], []>} : vector<16x32xf32>, vector<32x32xf32>, vector<16x32xf32> -> vector<16x32xf32>
    %c321 = arith.constant 321 : index
    %c0_18 = arith.constant 0 : index
    %43 = vector.load %arg1[%c321, %c0_18] : memref<328x32xf32, #tpu.memory_space<vmem>>, vector<1x32xf32>
    %44 = vector.broadcast %43 : vector<1x32xf32> to vector<16x32xf32>
    %45 = arith.addf %42, %44 : vector<16x32xf32>
    %46 = arith.addf %0, %45 : vector<16x32xf32>
    %c323 = arith.constant 323 : index
    %c0_19 = arith.constant 0 : index
    %47 = vector.load %arg1[%c323, %c0_19] : memref<328x32xf32, #tpu.memory_space<vmem>>, vector<1x32xf32>
    %c324 = arith.constant 324 : index
    %c0_20 = arith.constant 0 : index
    %48 = vector.load %arg1[%c324, %c0_20] : memref<328x32xf32, #tpu.memory_space<vmem>>, vector<1x32xf32>
    %cst_21 = arith.constant dense<0.000000e+00> : vector<16xf32>
    %49 = vector.multi_reduction <add>, %46, %cst_21 [1] : vector<16x32xf32> to vector<16xf32>
    %50 = vector.shape_cast %49 : vector<16xf32> to vector<16x1xf32>
    %cst_22 = arith.constant 3.200000e+01 : f32
    %51 = vector.broadcast %cst_22 : f32 to vector<16x1xf32>
    %52 = arith.divf %50, %51 : vector<16x1xf32>
    %53 = vector.broadcast %52 : vector<16x1xf32> to vector<16x32xf32>
    %54 = arith.subf %46, %53 : vector<16x32xf32>
    %55 = arith.mulf %54, %54 : vector<16x32xf32>
    %cst_23 = arith.constant dense<0.000000e+00> : vector<16xf32>
    %56 = vector.multi_reduction <add>, %55, %cst_23 [1] : vector<16x32xf32> to vector<16xf32>
    %57 = vector.shape_cast %56 : vector<16xf32> to vector<16x1xf32>
    %cst_24 = arith.constant 3.200000e+01 : f32
    %58 = vector.broadcast %cst_24 : f32 to vector<16x1xf32>
    %59 = arith.divf %57, %58 : vector<16x1xf32>
    %cst_25 = arith.constant 9.99999974E-6 : f32
    %60 = vector.broadcast %cst_25 : f32 to vector<16x1xf32>
    %61 = arith.addf %59, %60 : vector<16x1xf32>
    %62 = math.rsqrt %61 : vector<16x1xf32>
    %63 = vector.broadcast %62 : vector<16x1xf32> to vector<16x32xf32>
    %64 = arith.mulf %54, %63 : vector<16x32xf32>
    %65 = vector.broadcast %47 : vector<1x32xf32> to vector<16x32xf32>
    %66 = arith.mulf %64, %65 : vector<16x32xf32>
    %67 = vector.broadcast %48 : vector<1x32xf32> to vector<16x32xf32>
    %68 = arith.addf %66, %67 : vector<16x32xf32>
    %c128 = arith.constant 128 : index
    %c0_26 = arith.constant 0 : index
    %69 = vector.load %arg1[%c128, %c0_26] : memref<328x32xf32, #tpu.memory_space<vmem>>, vector<64x32xf32>
    %cst_27 = arith.constant dense<0.000000e+00> : vector<16x64xf32>
    %70 = tpu.matmul %68, %69, %cst_27 {dimension_numbers = #tpu.dot_dimension_numbers<[1], [1], [0], [0], [0, 0, 1, 0], [], []>} : vector<16x32xf32>, vector<64x32xf32>, vector<16x64xf32> -> vector<16x64xf32>
    %71 = vector.extract_strided_slice %3 {offsets = [1, 0], sizes = [1, 64], strides = [1, 1]} : vector<2x64xf32> to vector<1x64xf32>
    %72 = vector.broadcast %71 : vector<1x64xf32> to vector<16x64xf32>
    %73 = arith.addf %70, %72 : vector<16x64xf32>
    %cst_28 = arith.constant 0.000000e+00 : f32
    %74 = vector.broadcast %cst_28 : f32 to vector<16x64xf32>
    %75 = arith.maximumf %73, %74 : vector<16x64xf32>
    %c192 = arith.constant 192 : index
    %c0_29 = arith.constant 0 : index
    %76 = vector.load %arg1[%c192, %c0_29] : memref<328x32xf32, #tpu.memory_space<vmem>>, vector<64x32xf32>
    %cst_30 = arith.constant dense<0.000000e+00> : vector<16x32xf32>
    %77 = tpu.matmul %75, %76, %cst_30 {dimension_numbers = #tpu.dot_dimension_numbers<[1], [0], [0], [1], [0, 0, 1, 1], [], []>} : vector<16x64xf32>, vector<64x32xf32>, vector<16x32xf32> -> vector<16x32xf32>
    %c322 = arith.constant 322 : index
    %c0_31 = arith.constant 0 : index
    %78 = vector.load %arg1[%c322, %c0_31] : memref<328x32xf32, #tpu.memory_space<vmem>>, vector<1x32xf32>
    %79 = vector.broadcast %78 : vector<1x32xf32> to vector<16x32xf32>
    %80 = arith.addf %77, %79 : vector<16x32xf32>
    %81 = arith.addf %68, %80 : vector<16x32xf32>
    %c325 = arith.constant 325 : index
    %c0_32 = arith.constant 0 : index
    %82 = vector.load %arg1[%c325, %c0_32] : memref<328x32xf32, #tpu.memory_space<vmem>>, vector<1x32xf32>
    %c326 = arith.constant 326 : index
    %c0_33 = arith.constant 0 : index
    %83 = vector.load %arg1[%c326, %c0_33] : memref<328x32xf32, #tpu.memory_space<vmem>>, vector<1x32xf32>
    %cst_34 = arith.constant dense<0.000000e+00> : vector<16xf32>
    %84 = vector.multi_reduction <add>, %81, %cst_34 [1] : vector<16x32xf32> to vector<16xf32>
    %85 = vector.shape_cast %84 : vector<16xf32> to vector<16x1xf32>
    %cst_35 = arith.constant 3.200000e+01 : f32
    %86 = vector.broadcast %cst_35 : f32 to vector<16x1xf32>
    %87 = arith.divf %85, %86 : vector<16x1xf32>
    %88 = vector.broadcast %87 : vector<16x1xf32> to vector<16x32xf32>
    %89 = arith.subf %81, %88 : vector<16x32xf32>
    %90 = arith.mulf %89, %89 : vector<16x32xf32>
    %cst_36 = arith.constant dense<0.000000e+00> : vector<16xf32>
    %91 = vector.multi_reduction <add>, %90, %cst_36 [1] : vector<16x32xf32> to vector<16xf32>
    %92 = vector.shape_cast %91 : vector<16xf32> to vector<16x1xf32>
    %cst_37 = arith.constant 3.200000e+01 : f32
    %93 = vector.broadcast %cst_37 : f32 to vector<16x1xf32>
    %94 = arith.divf %92, %93 : vector<16x1xf32>
    %cst_38 = arith.constant 9.99999974E-6 : f32
    %95 = vector.broadcast %cst_38 : f32 to vector<16x1xf32>
    %96 = arith.addf %94, %95 : vector<16x1xf32>
    %97 = math.rsqrt %96 : vector<16x1xf32>
    %98 = vector.broadcast %97 : vector<16x1xf32> to vector<16x32xf32>
    %99 = arith.mulf %89, %98 : vector<16x32xf32>
    %100 = vector.broadcast %82 : vector<1x32xf32> to vector<16x32xf32>
    %101 = arith.mulf %99, %100 : vector<16x32xf32>
    %102 = vector.broadcast %83 : vector<1x32xf32> to vector<16x32xf32>
    %103 = arith.addf %101, %102 : vector<16x32xf32>
    %c0_39 = arith.constant 0 : index
    %c0_40 = arith.constant 0 : index
    %104 = vector.load %arg4[%c0_39, %c0_40] : memref<16x32xf32, #tpu.memory_space<vmem>>, vector<16x32xf32>
    tpu.vector_store %arg4[%c0_39, %c0_40], %103 {strides = array<i32>} : memref<16x32xf32, #tpu.memory_space<vmem>>, vector<16x32xf32>,
    return
  }
}

</mosaic_0001>

<llo_original>
// kernel: transformer_layer.1
$region0: #{transformer_layer.1}
  #allocation0 [shape = 'u32[]', space=smem, size = 0x4, offset = 0x4, fixed_abs, tag = 'smem constant byte address 0x4 - core index']
  #allocation1 [shape = 'u32[144,128]{1,0:T(1,128)}', space=vmem, size = 0x12000, scoped, tag = 'internal scratch']
  %s0 = inlined_call_operand.vmem [shape: f32[32,32], index: 0, kind: input, shape index: {}]
  %s1 = inlined_call_operand.vmem [shape: f32[328,32], index: 1, kind: input, shape index: {}]
  %s2 = inlined_call_operand.vmem [shape: f32[2,64], index: 2, kind: input, shape index: {}]
  %s3 = inlined_call_operand.vmem [shape: f32[64,16], index: 3, kind: input, shape index: {}]
  %s4 = inlined_call_operand.hbm [shape: f32[16,32], index: 4, kind: output, shape index: {}]
  %s5 = sld [smem:[#allocation0]]
  $region26: #{transformer_layer.1} parent=0
    _
  %s7 = ssub.s32 1, %s5
  %s8 = scalar_select 0, %s7, %s5
  $region1: #{transformer_layer.1} parent=0
    #allocation2 [shape = 'u8[8192]{0}', space=vmem, size = 0x2000, scoped, tag = 'output window, operand 0, single buffered']
    #allocation3 [shape = 's32[1]{0}', space=sflag, size = 0x4, scoped, tag = 'scoped memory for transformer_layer.1']
    %9 = vsyncpa [#allocation3], 0
    // Predicated region
    $region2: #{transformer_layer.1} parent=1 // pred_check
      _
    $region3: #{transformer_layer.1} parent=1 // pred_check_branch
      %11 = sbr.rel (0) target = $region5
    $region4: #{transformer_layer.1} parent=1 // pred_region
      _
    $region5: #{transformer_layer.1} parent=1 // pred_fallthru
      _
    // Predicated region
    $region6: #{transformer_layer.1} parent=1 // pred_check
      _
    $region7: #{transformer_layer.1} parent=1 // pred_check_branch
      %13 = sbr.rel (0) target = $region9
    $region8: #{transformer_layer.1} parent=1 // pred_region
      _
    $region9: #{transformer_layer.1} parent=1 // pred_fallthru
      _
    // Predicated region
    $region10: #{transformer_layer.1} parent=1 // pred_check
      _
    $region11: #{transformer_layer.1} parent=1 // pred_check_branch
      %15 = sbr.rel (0) target = $region13
    $region12: #{transformer_layer.1} parent=1 // pred_region
      _
    $region13: #{transformer_layer.1} parent=1 // pred_fallthru
      _
    // Predicated region
    $region14: #{transformer_layer.1} parent=1 // pred_check
      _
    $region15: #{transformer_layer.1} parent=1 // pred_check_branch
      %17 = sbr.rel (0) target = $region17
    $region16: #{transformer_layer.1} parent=1 // pred_region
      _
    $region17: #{transformer_layer.1} parent=1 // pred_fallthru
      _
    %v18 = vld [vmem:[%s0] sm:$0xff]
    %v19 = vld [vmem:[%s0 + $0x8] sm:$0xff]
    %v20 = vld [vmem:[%s0 + $0x10] sm:$0xff]
    %v21 = vld [vmem:[%s0 + $0x18] sm:$0xff]
    %v22 = vadd.f32 %v18, %v20
    %v23 = vadd.f32 %v19, %v21
    %v24 = vld [vmem:[%s2] sm:$0x3]
    %v25 = vld [vmem:[%s1] sm:$0xff]
    %v26 = vld [vmem:[%s1 + $0x8] sm:$0xff]
    %v27 = vld [vmem:[%s1 + $0x10] sm:$0xff]
    %v28 = vld [vmem:[%s1 + $0x18] sm:$0xff]
    %v29 = vld [vmem:[%s1 + $0x20] sm:$0xff]
    %v30 = vld [vmem:[%s1 + $0x28] sm:$0xff]
    %v31 = vld [vmem:[%s1 + $0x30] sm:$0xff]
    %v32 = vld [vmem:[%s1 + $0x38] sm:$0xff]
    %v33 = vlaneseq
    %v34 = vshrl.u32 %v33, 7
    %v35 = vsub.s32 0, %v34
    %v36 = vrot.slane %v24, %v35
    %vm37 = vcmask 261120
    %v39 = vsel %vm37, %v22, 0
    %v42 = vsel %vm37, %v23, 0
    %v45 = vsel %vm37, %v25, 0
    %v48 = vsel %vm37, %v26, 0
    %v51 = vsel %vm37, %v27, 0
    %v54 = vsel %vm37, %v28, 0
    %v57 = vsel %vm37, %v29, 0
    %v60 = vsel %vm37, %v30, 0
    %v63 = vsel %vm37, %v31, 0
    %v66 = vsel %vm37, %v32, 0
    %68 = vmatprep.subr.mxu0 0.0
    %69 = vmatpush1.xpose.msra.mxu0 0.0
    %70 = vmatprep.subr.mxu0 0.0
    %71 = vmatpush1.xpose.msra.mxu0 0.0
    %72 = vmatprep.subr.mxu0 0.0
    %73 = vmatpush1.xpose.msra.mxu0 0.0
    %74 = vmatprep.subr.mxu0 0.0
    %75 = vmatpush1.xpose.msra.mxu0 0.0
    %76 = vmatprep.subr.mxu0 0.0
    %77 = vmatpush1.xpose.msra.mxu0 0.0
    %78 = vmatprep.subr.mxu0 0.0
    %79 = vmatpush1.xpose.msra.mxu0 0.0
    %80 = vmatprep.subr.mxu0 0.0
    %81 = vmatpush1.xpose.msra.mxu0 0.0
    %82 = vmatprep.subr.mxu0 0.0
    %83 = vmatpush1.xpose.msra.mxu0 0.0
    %84 = vmatprep.subr.mxu0 0.0
    %85 = vmatpush1.xpose.msra.mxu0 %v66
    %86 = vmatprep.subr.mxu0 0.0
    %87 = vmatpush1.xpose.msra.mxu0 %v63
    %88 = vmatprep.subr.mxu0 0.0
    %89 = vmatpush1.xpose.msra.mxu0 %v60
    %90 = vmatprep.subr.mxu0 0.0
    %91 = vmatpush1.xpose.msra.mxu0 %v57
    %92 = vmatprep.subr.mxu0 0.0
    %93 = vmatpush1.xpose.msra.mxu0 %v54
    %94 = vmatprep.subr.mxu0 0.0
    %95 = vmatpush1.xpose.msra.mxu0 %v51
    %96 = vmatprep.subr.mxu0 0.0
    %97 = vmatpush1.xpose.msra.mxu0 %v48
    %98 = vmatprep.subr.mxu0 0.0
    %99 = vmatpush1.xpose.msra.mxu0 %v45
    %100 = vmatprep.subr.mxu0 0.0
    %101 = vmatpush2.xpose.msra.mxu0 0.0
    %102 = vmatprep.subr.mxu0 0.0
    %103 = vmatpush2.xpose.msra.mxu0 0.0
    %104 = vmatprep.subr.mxu0 0.0
    %105 = vmatpush2.xpose.msra.mxu0 0.0
    %106 = vmatprep.subr.mxu0 0.0
    %107 = vmatpush2.xpose.msra.mxu0 0.0
    %108 = vmatprep.subr.mxu0 0.0
    %109 = vmatpush2.xpose.msra.mxu0 0.0
    %110 = vmatprep.subr.mxu0 0.0
    %111 = vmatpush2.xpose.msra.mxu0 0.0
    %112 = vmatprep.subr.mxu0 0.0
    %113 = vmatpush2.xpose.msra.mxu0 0.0
    %114 = vmatprep.subr.mxu0 0.0
    %115 = vmatpush2.xpose.msra.mxu0 0.0
    %116 = vmatprep.subr.mxu0 0.0
    %117 = vmatpush2.xpose.msra.mxu0 0.0
    %118 = vmatprep.subr.mxu0 0.0
    %119 = vmatpush2.xpose.msra.mxu0 0.0
    %120 = vmatprep.subr.mxu0 0.0
    %121 = vmatpush2.xpose.msra.mxu0 0.0
    %122 = vmatprep.subr.mxu0 0.0
    %123 = vmatpush2.xpose.msra.mxu0 0.0
    %124 = vmatprep.subr.mxu0 0.0
    %125 = vmatpush2.xpose.msra.mxu0 0.0
    %126 = vmatprep.subr.mxu0 0.0
    %127 = vmatpush2.xpose.msra.mxu0 0.0
    %128 = vmatprep.subr.mxu0 0.0
    %129 = vmatpush2.xpose.msra.mxu0 0.0
    %130 = vmatprep.subr.mxu0 0.0
    %131 = vmatpush2.xpose.msra.mxu0 0.0
    %132 = vmatprep.mubr.f32.mxu0 0.0
    %133 = vmatmul.mubr.f32.gmra.mxu0 %v39
    %v134 = vpop.f32.mrf.mxu0
    %v135 = vadd.f32 %v36, %v134
    %v136 = vpop.f32.mrf.mxu0
    %137 = vmatprep.mubr.f32.mxu0 0.0
    %138 = vmatmul.mubr.f32.gmra.mxu0 %v42
    %v139 = vpop.f32.mrf.mxu0
    %v140 = vadd.f32 %v36, %v139
    %v141 = vpop.f32.mrf.mxu0
    %142 = vdwg.mxu0
    %v143 = vld [vmem:[%s1 + $0x40] sm:$0xff]
    %v144 = vld [vmem:[%s1 + $0x48] sm:$0xff]
    %v145 = vld [vmem:[%s1 + $0x50] sm:$0xff]
    %v146 = vld [vmem:[%s1 + $0x58] sm:$0xff]
    %v147 = vld [vmem:[%s1 + $0x140] sm:$0x1]
    %v148 = vlaneseq
    %v149 = vshrl.u32 %v148, 7
    %v150 = vsub.s32 0, %v149
    %v151 = vrot.slane %v147, %v150
    %v153 = vsel %vm37, %v18, 0
    %v156 = vsel %vm37, %v19, 0
    %v159 = vsel %vm37, %v143, 0
    %v162 = vsel %vm37, %v144, 0
    %v165 = vsel %vm37, %v145, 0
    %v168 = vsel %vm37, %v146, 0
    %170 = vmatprep.subr.mxu0 0.0
    %171 = vmatpush1.xpose.msra.mxu0 0.0
    %172 = vmatprep.subr.mxu0 0.0
    %173 = vmatpush1.xpose.msra.mxu0 0.0
    %174 = vmatprep.subr.mxu0 0.0
    %175 = vmatpush1.xpose.msra.mxu0 0.0
    %176 = vmatprep.subr.mxu0 0.0
    %177 = vmatpush1.xpose.msra.mxu0 0.0
    %178 = vmatprep.subr.mxu0 0.0
    %179 = vmatpush1.xpose.msra.mxu0 0.0
    %180 = vmatprep.subr.mxu0 0.0
    %181 = vmatpush1.xpose.msra.mxu0 0.0
    %182 = vmatprep.subr.mxu0 0.0
    %183 = vmatpush1.xpose.msra.mxu0 0.0
    %184 = vmatprep.subr.mxu0 0.0
    %185 = vmatpush1.xpose.msra.mxu0 0.0
    %186 = vmatprep.subr.mxu0 0.0
    %187 = vmatpush1.xpose.msra.mxu0 0.0
    %188 = vmatprep.subr.mxu0 0.0
    %189 = vmatpush1.xpose.msra.mxu0 0.0
    %190 = vmatprep.subr.mxu0 0.0
    %191 = vmatpush1.xpose.msra.mxu0 0.0
    %192 = vmatprep.subr.mxu0 0.0
    %193 = vmatpush1.xpose.msra.mxu0 0.0
    %194 = vmatprep.subr.mxu0 0.0
    %195 = vmatpush1.xpose.msra.mxu0 %v168
    %196 = vmatprep.subr.mxu0 0.0
    %197 = vmatpush1.xpose.msra.mxu0 %v165
    %198 = vmatprep.subr.mxu0 0.0
    %199 = vmatpush1.xpose.msra.mxu0 %v162
    %200 = vmatprep.subr.mxu0 0.0
    %201 = vmatpush1.xpose.msra.mxu0 %v159
    %202 = vmatprep.subr.mxu0 0.0
    %203 = vmatpush2.xpose.msra.mxu0 0.0
    %204 = vmatprep.subr.mxu0 0.0
    %205 = vmatpush2.xpose.msra.mxu0 0.0
    %206 = vmatprep.subr.mxu0 0.0
    %207 = vmatpush2.xpose.msra.mxu0 0.0
    %208 = vmatprep.subr.mxu0 0.0
    %209 = vmatpush2.xpose.msra.mxu0 0.0
    %210 = vmatprep.subr.mxu0 0.0
    %211 = vmatpush2.xpose.msra.mxu0 0.0
    %212 = vmatprep.subr.mxu0 0.0
    %213 = vmatpush2.xpose.msra.mxu0 0.0
    %214 = vmatprep.subr.mxu0 0.0
    %215 = vmatpush2.xpose.msra.mxu0 0.0
    %216 = vmatprep.subr.mxu0 0.0
    %217 = vmatpush2.xpose.msra.mxu0 0.0
    %218 = vmatprep.subr.mxu0 0.0
    %219 = vmatpush2.xpose.msra.mxu0 0.0
    %220 = vmatprep.subr.mxu0 0.0
    %221 = vmatpush2.xpose.msra.mxu0 0.0
    %222 = vmatprep.subr.mxu0 0.0
    %223 = vmatpush2.xpose.msra.mxu0 0.0
    %224 = vmatprep.subr.mxu0 0.0
    %225 = vmatpush2.xpose.msra.mxu0 0.0
    %226 = vmatprep.subr.mxu0 0.0
    %227 = vmatpush2.xpose.msra.mxu0 0.0
    %228 = vmatprep.subr.mxu0 0.0
    %229 = vmatpush2.xpose.msra.mxu0 0.0
    %230 = vmatprep.subr.mxu0 0.0
    %231 = vmatpush2.xpose.msra.mxu0 0.0
    %232 = vmatprep.subr.mxu0 0.0
    %233 = vmatpush2.xpose.msra.mxu0 0.0
    %234 = vmatprep.mubr.f32.mxu0 0.0
    %235 = vmatmul.mubr.f32.gmra.mxu0 %v153
    %v236 = vpop.f32.mrf.mxu0
    %v237 = vadd.f32 %v151, %v236
    %v238 = vpop.f32.mrf.mxu0
    %239 = vmatprep.mubr.f32.mxu0 0.0
    %240 = vmatmul.mubr.f32.gmra.mxu0 %v156
    %v241 = vpop.f32.mrf.mxu0
    %v242 = vadd.f32 %v151, %v241
    %v243 = vpop.f32.mrf.mxu0
    %244 = vdwg.mxu0
    %v245 = vld [vmem:[%s1 + $0x100] sm:$0xff]
    %v246 = vld [vmem:[%s1 + $0x108] sm:$0xff]
    %v247 = vld [vmem:[%s1 + $0x110] sm:$0xff]
    %v248 = vld [vmem:[%s1 + $0x118] sm:$0xff]
    %v249 = vld [vmem:[%s1 + $0x120] sm:$0xff]
    %v250 = vld [vmem:[%s1 + $0x128] sm:$0xff]
    %v251 = vld [vmem:[%s1 + $0x130] sm:$0xff]
    %v252 = vld [vmem:[%s1 + $0x138] sm:$0xff]
    %v253 = vmul.f32 %v135, %v245
    %v254 = vmul.f32 %v140, %v246
    %v255 = vmul.f32 %v135, %v247
    %v256 = vmul.f32 %v140, %v248
    %v257 = vmul.f32 %v135, %v249
    %v258 = vmul.f32 %v140, %v250
    %v259 = vmul.f32 %v135, %v251
    %v260 = vmul.f32 %v140, %v252
    %v261 = vld [vmem:[%s3] sm:$0xff]
    %v262 = vld [vmem:[%s3 + $0x8] sm:$0xff]
    %v263 = vld [vmem:[%s3 + $0x10] sm:$0xff]
    %v264 = vld [vmem:[%s3 + $0x18] sm:$0xff]
    %v265 = vld [vmem:[%s3 + $0x20] sm:$0xff]
    %v266 = vld [vmem:[%s3 + $0x28] sm:$0xff]
    %v267 = vld [vmem:[%s3 + $0x30] sm:$0xff]
    %v268 = vld [vmem:[%s3 + $0x38] sm:$0xff]
    %271 = vrot.lane.b32.xlu0 %v135, 96
    %v272 = vpop.permute.xlu0 %271
    %273 = vrot.lane.b32.xlu0 %v140, 96
    %v274 = vpop.permute.xlu0 %273
    %v276 = vsel %vm37, %v253, 0
    %v279 = vsel %vm37, %v254, 0
    %v282 = vsel %vm37, %v255, 0
    %v285 = vsel %vm37, %v256, 0
    %v288 = vsel %vm37, %v257, 0
    %v291 = vsel %vm37, %v258, 0
    %v294 = vsel %vm37, %v259, 0
    %v297 = vsel %vm37, %v260, 0
    %v299 = vsel %vm37, %v272, 0
    %v301 = vsel %vm37, %v274, 0
    %303 = vmatprep.subr.mxu0 0.0
    %304 = vmatpush1.xpose.msra.mxu0 0.0
    %305 = vmatprep.subr.mxu0 0.0
    %306 = vmatpush1.xpose.msra.mxu0 0.0
    %307 = vmatprep.subr.mxu0 0.0
    %308 = vmatpush1.xpose.msra.mxu0 0.0
    %309 = vmatprep.subr.mxu0 0.0
    %310 = vmatpush1.xpose.msra.mxu0 0.0
    %311 = vmatprep.subr.mxu0 0.0
    %312 = vmatpush1.xpose.msra.mxu0 0.0
    %313 = vmatprep.subr.mxu0 0.0
    %314 = vmatpush1.xpose.msra.mxu0 0.0
    %315 = vmatprep.subr.mxu0 0.0
    %316 = vmatpush1.xpose.msra.mxu0 0.0
    %317 = vmatprep.subr.mxu0 0.0
    %318 = vmatpush1.xpose.msra.mxu0 0.0
    %319 = vmatprep.subr.mxu0 0.0
    %320 = vmatpush1.xpose.msra.mxu0 0.0
    %321 = vmatprep.subr.mxu0 0.0
    %322 = vmatpush1.xpose.msra.mxu0 0.0
    %323 = vmatprep.subr.mxu0 0.0
    %324 = vmatpush1.xpose.msra.mxu0 0.0
    %325 = vmatprep.subr.mxu0 0.0
    %326 = vmatpush1.xpose.msra.mxu0 0.0
    %327 = vmatprep.subr.mxu0 0.0
    %328 = vmatpush1.xpose.msra.mxu0 0.0
    %329 = vmatprep.subr.mxu0 0.0
    %330 = vmatpush1.xpose.msra.mxu0 0.0
    %331 = vmatprep.subr.mxu0 0.0
    %332 = vmatpush1.xpose.msra.mxu0 %v301
    %333 = vmatprep.subr.mxu0 0.0
    %334 = vmatpush1.xpose.msra.mxu0 %v299
    %335 = vmatprep.subr.mxu0 0.0
    %336 = vmatpush2.xpose.msra.mxu0 0.0
    %337 = vmatprep.subr.mxu0 0.0
    %338 = vmatpush2.xpose.msra.mxu0 0.0
    %339 = vmatprep.subr.mxu0 0.0
    %340 = vmatpush2.xpose.msra.mxu0 0.0
    %341 = vmatprep.subr.mxu0 0.0
    %342 = vmatpush2.xpose.msra.mxu0 0.0
    %343 = vmatprep.subr.mxu0 0.0
    %344 = vmatpush2.xpose.msra.mxu0 0.0
    %345 = vmatprep.subr.mxu0 0.0
    %346 = vmatpush2.xpose.msra.mxu0 0.0
    %347 = vmatprep.subr.mxu0 0.0
    %348 = vmatpush2.xpose.msra.mxu0 0.0
    %349 = vmatprep.subr.mxu0 0.0
    %350 = vmatpush2.xpose.msra.mxu0 0.0
    %351 = vmatprep.subr.mxu0 0.0
    %352 = vmatpush2.xpose.msra.mxu0 0.0
    %353 = vmatprep.subr.mxu0 0.0
    %354 = vmatpush2.xpose.msra.mxu0 0.0
    %355 = vmatprep.subr.mxu0 0.0
    %356 = vmatpush2.xpose.msra.mxu0 0.0
    %357 = vmatprep.subr.mxu0 0.0
    %358 = vmatpush2.xpose.msra.mxu0 0.0
    %359 = vmatprep.subr.mxu0 0.0
    %360 = vmatpush2.xpose.msra.mxu0 0.0
    %361 = vmatprep.subr.mxu0 0.0
    %362 = vmatpush2.xpose.msra.mxu0 0.0
    %363 = vmatprep.subr.mxu0 0.0
    %364 = vmatpush2.xpose.msra.mxu0 0.0
    %365 = vmatprep.subr.mxu0 0.0
    %366 = vmatpush2.xpose.msra.mxu0 0.0
    %367 = vmatprep.mubr.f32.mxu0 0.0
    %368 = vmatmul.mubr.f32.gmra.mxu0 %v276
    %v369 = vpop.f32.mrf.mxu0
    %v370 = vadd.f32 %v261, %v369
    %v371 = vpop.f32.mrf.mxu0
    %372 = vmatprep.mubr.f32.mxu0 0.0
    %373 = vmatmul.mubr.f32.gmra.mxu0 %v279
    %v374 = vpop.f32.mrf.mxu0
    %v375 = vadd.f32 %v262, %v374
    %v376 = vpop.f32.mrf.mxu0
    %377 = vmatprep.mubr.f32.mxu0 0.0
    %378 = vmatmul.mubr.f32.gmra.mxu0 %v282
    %v379 = vpop.f32.mrf.mxu0
    %v380 = vadd.f32 %v263, %v379
    %v381 = vpop.f32.mrf.mxu0
    %382 = vmatprep.mubr.f32.mxu0 0.0
    %383 = vmatmul.mubr.f32.gmra.mxu0 %v285
    %v384 = vpop.f32.mrf.mxu0
    %v385 = vadd.f32 %v264, %v384
    %v386 = vpop.f32.mrf.mxu0
    %387 = vmatprep.mubr.f32.mxu0 0.0
    %388 = vmatmul.mubr.f32.gmra.mxu0 %v288
    %v389 = vpop.f32.mrf.mxu0
    %v390 = vadd.f32 %v265, %v389
    %v391 = vpop.f32.mrf.mxu0
    %392 = vmatprep.mubr.f32.mxu0 0.0
    %393 = vmatmul.mubr.f32.gmra.mxu0 %v291
    %v394 = vpop.f32.mrf.mxu0
    %v395 = vadd.f32 %v266, %v394
    %v396 = vpop.f32.mrf.mxu0
    %397 = vmatprep.mubr.f32.mxu0 0.0
    %398 = vmatmul.mubr.f32.gmra.mxu0 %v294
    %v399 = vpop.f32.mrf.mxu0
    %v400 = vadd.f32 %v267, %v399
    %v401 = vpop.f32.mrf.mxu0
    %402 = vmatprep.mubr.f32.mxu0 0.0
    %403 = vmatmul.mubr.f32.gmra.mxu0 %v297
    %v404 = vpop.f32.mrf.mxu0
    %v405 = vadd.f32 %v268, %v404
    %v406 = vpop.f32.mrf.mxu0
    %407 = vdwg.mxu0
    %vm408 = vcmask 130048
    %v409 = vsel %vm408, %v370, -inf
    %410 = vmax.xlane.f32.xlu0 %v409
    %v411 = vpop.xlane.xlu0 %410
    %v412 = vsel %vm408, %v375, -inf
    %413 = vmax.xlane.f32.xlu0 %v412
    %v414 = vpop.xlane.xlu0 %413
    %v415 = vsel %vm408, %v380, -inf
    %416 = vmax.xlane.f32.xlu0 %v415
    %v417 = vpop.xlane.xlu0 %416
    %v418 = vsel %vm408, %v385, -inf
    %419 = vmax.xlane.f32.xlu0 %v418
    %v420 = vpop.xlane.xlu0 %419
    %v421 = vsel %vm408, %v390, -inf
    %422 = vmax.xlane.f32.xlu0 %v421
    %v423 = vpop.xlane.xlu0 %422
    %v424 = vsel %vm408, %v395, -inf
    %425 = vmax.xlane.f32.xlu0 %v424
    %v426 = vpop.xlane.xlu0 %425
    %v427 = vsel %vm408, %v400, -inf
    %428 = vmax.xlane.f32.xlu0 %v427
    %v429 = vpop.xlane.xlu0 %428
    %v430 = vsel %vm408, %v405, -inf
    %431 = vmax.xlane.f32.xlu0 %v430
    %v432 = vpop.xlane.xlu0 %431
    %v433 = vsub.f32 %v370, %v411
    %v434 = vsub.f32 %v375, %v414
    %v435 = vsub.f32 %v380, %v417
    %v436 = vsub.f32 %v385, %v420
    %v437 = vsub.f32 %v390, %v423
    %v438 = vsub.f32 %v395, %v426
    %v439 = vsub.f32 %v400, %v429
    %v440 = vsub.f32 %v405, %v432
    %v441 = vmul.f32 %v433, 1.442695
    %v442 = vpow.pop %v441
    %v443 = vmul.f32 %v434, 1.442695
    %v444 = vpow.pop %v443
    %v445 = vmul.f32 %v435, 1.442695
    %v446 = vpow.pop %v445
    %v447 = vmul.f32 %v436, 1.442695
    %v448 = vpow.pop %v447
    %v449 = vmul.f32 %v437, 1.442695
    %v450 = vpow.pop %v449
    %v451 = vmul.f32 %v438, 1.442695
    %v452 = vpow.pop %v451
    %v453 = vmul.f32 %v439, 1.442695
    %v454 = vpow.pop %v453
    %v455 = vmul.f32 %v440, 1.442695
    %v456 = vpow.pop %v455
    %v457 = vsel %vm408, %v442, 0.0
    %458 = vadd.xlane.f32.xlu0 %v457
    %v459 = vpop.xlane.xlu0 %458
    %v460 = vsel %vm408, %v444, 0.0
    %461 = vadd.xlane.f32.xlu0 %v460
    %v462 = vpop.xlane.xlu0 %461
    %v463 = vsel %vm408, %v446, 0.0
    %464 = vadd.xlane.f32.xlu0 %v463
    %v465 = vpop.xlane.xlu0 %464
    %v466 = vsel %vm408, %v448, 0.0
    %467 = vadd.xlane.f32.xlu0 %v466
    %v468 = vpop.xlane.xlu0 %467
    %v469 = vsel %vm408, %v450, 0.0
    %470 = vadd.xlane.f32.xlu0 %v469
    %v471 = vpop.xlane.xlu0 %470
    %v472 = vsel %vm408, %v452, 0.0
    %473 = vadd.xlane.f32.xlu0 %v472
    %v474 = vpop.xlane.xlu0 %473
    %v475 = vsel %vm408, %v454, 0.0
    %476 = vadd.xlane.f32.xlu0 %v475
    %v477 = vpop.xlane.xlu0 %476
    %v478 = vsel %vm408, %v456, 0.0
    %479 = vadd.xlane.f32.xlu0 %v478
    %v480 = vpop.xlane.xlu0 %479
    %v481 = vrcp.pop %v459
    %v482 = vrcp.pop %v462
    %v483 = vrcp.pop %v465
    %v484 = vrcp.pop %v468
    %v485 = vrcp.pop %v471
    %v486 = vrcp.pop %v474
    %v487 = vrcp.pop %v477
    %v488 = vrcp.pop %v480
    %v489 = vmul.f32 %v442, %v481
    %v490 = vmul.f32 %v444, %v482
    %v491 = vmul.f32 %v446, %v483
    %v492 = vmul.f32 %v448, %v484
    %v493 = vmul.f32 %v450, %v485
    %v494 = vmul.f32 %v452, %v486
    %v495 = vmul.f32 %v454, %v487
    %v496 = vmul.f32 %v456, %v488
    %v498 = vsel %vm408, %v489, 0
    %v501 = vsel %vm408, %v490, 0
    %v504 = vsel %vm408, %v491, 0
    %v507 = vsel %vm408, %v492, 0
    %v510 = vsel %vm408, %v493, 0
    %v513 = vsel %vm408, %v494, 0
    %v516 = vsel %vm408, %v495, 0
    %v519 = vsel %vm408, %v496, 0
    %521 = vmatprep.subr.mxu0 0.0
    %522 = vmatpush1.msra.mxu0 0.0
    %523 = vmatprep.subr.mxu0 0.0
    %524 = vmatpush1.msra.mxu0 0.0
    %525 = vmatprep.subr.mxu0 0.0
    %526 = vmatpush1.msra.mxu0 0.0
    %527 = vmatprep.subr.mxu0 0.0
    %528 = vmatpush1.msra.mxu0 0.0
    %529 = vmatprep.subr.mxu0 0.0
    %530 = vmatpush1.msra.mxu0 0.0
    %531 = vmatprep.subr.mxu0 0.0
    %532 = vmatpush1.msra.mxu0 0.0
    %533 = vmatprep.subr.mxu0 0.0
    %534 = vmatpush1.msra.mxu0 0.0
    %535 = vmatprep.subr.mxu0 0.0
    %536 = vmatpush1.msra.mxu0 0.0
    %537 = vmatprep.subr.mxu0 0.0
    %538 = vmatpush1.msra.mxu0 0.0
    %539 = vmatprep.subr.mxu0 0.0
    %540 = vmatpush1.msra.mxu0 0.0
    %541 = vmatprep.subr.mxu0 0.0
    %542 = vmatpush1.msra.mxu0 0.0
    %543 = vmatprep.subr.mxu0 0.0
    %544 = vmatpush1.msra.mxu0 0.0
    %545 = vmatprep.subr.mxu0 0.0
    %546 = vmatpush1.msra.mxu0 0.0
    %547 = vmatprep.subr.mxu0 0.0
    %548 = vmatpush1.msra.mxu0 0.0
    %549 = vmatprep.subr.mxu0 0.0
    %550 = vmatpush1.msra.mxu0 %v242
    %551 = vmatprep.subr.mxu0 0.0
    %552 = vmatpush1.msra.mxu0 %v237
    %553 = vmatprep.subr.mxu0 0.0
    %554 = vmatpush2.msra.mxu0 0.0
    %555 = vmatprep.subr.mxu0 0.0
    %556 = vmatpush2.msra.mxu0 0.0
    %557 = vmatprep.subr.mxu0 0.0
    %558 = vmatpush2.msra.mxu0 0.0
    %559 = vmatprep.subr.mxu0 0.0
    %560 = vmatpush2.msra.mxu0 0.0
    %561 = vmatprep.subr.mxu0 0.0
    %562 = vmatpush2.msra.mxu0 0.0
    %563 = vmatprep.subr.mxu0 0.0
    %564 = vmatpush2.msra.mxu0 0.0
    %565 = vmatprep.subr.mxu0 0.0
    %566 = vmatpush2.msra.mxu0 0.0
    %567 = vmatprep.subr.mxu0 0.0
    %568 = vmatpush2.msra.mxu0 0.0
    %569 = vmatprep.subr.mxu0 0.0
    %570 = vmatpush2.msra.mxu0 0.0
    %571 = vmatprep.subr.mxu0 0.0
    %572 = vmatpush2.msra.mxu0 0.0
    %573 = vmatprep.subr.mxu0 0.0
    %574 = vmatpush2.msra.mxu0 0.0
    %575 = vmatprep.subr.mxu0 0.0
    %576 = vmatpush2.msra.mxu0 0.0
    %577 = vmatprep.subr.mxu0 0.0
    %578 = vmatpush2.msra.mxu0 0.0
    %579 = vmatprep.subr.mxu0 0.0
    %580 = vmatpush2.msra.mxu0 0.0
    %581 = vmatprep.subr.mxu0 0.0
    %582 = vmatpush2.msra.mxu0 0.0
    %583 = vmatprep.subr.mxu0 0.0
    %584 = vmatpush2.msra.mxu0 0.0
    %585 = vmatprep.mubr.f32.mxu0 0.0
    %586 = vmatmul.mubr.f32.gmra.mxu0 %v498
    %v587 = vpop.f32.mrf.mxu0
    %v588 = vadd.f32 0.0, %v587
    %v589 = vpop.f32.mrf.mxu0
    %590 = vmatprep.mubr.f32.mxu0 0.0
    %591 = vmatmul.mubr.f32.gmra.mxu0 %v501
    %v592 = vpop.f32.mrf.mxu0
    %v593 = vadd.f32 0.0, %v592
    %v594 = vpop.f32.mrf.mxu0
    %595 = vmatprep.mubr.f32.mxu0 0.0
    %596 = vmatmul.mubr.f32.gmra.mxu0 %v504
    %v597 = vpop.f32.mrf.mxu0
    %v598 = vadd.f32 0.0, %v597
    %v599 = vpop.f32.mrf.mxu0
    %600 = vmatprep.mubr.f32.mxu0 0.0
    %601 = vmatmul.mubr.f32.gmra.mxu0 %v507
    %v602 = vpop.f32.mrf.mxu0
    %v603 = vadd.f32 0.0, %v602
    %v604 = vpop.f32.mrf.mxu0
    %605 = vmatprep.mubr.f32.mxu0 0.0
    %606 = vmatmul.mubr.f32.gmra.mxu0 %v510
    %v607 = vpop.f32.mrf.mxu0
    %v608 = vadd.f32 0.0, %v607
    %v609 = vpop.f32.mrf.mxu0
    %610 = vmatprep.mubr.f32.mxu0 0.0
    %611 = vmatmul.mubr.f32.gmra.mxu0 %v513
    %v612 = vpop.f32.mrf.mxu0
    %v613 = vadd.f32 0.0, %v612
    %v614 = vpop.f32.mrf.mxu0
    %615 = vmatprep.mubr.f32.mxu0 0.0
    %616 = vmatmul.mubr.f32.gmra.mxu0 %v516
    %v617 = vpop.f32.mrf.mxu0
    %v618 = vadd.f32 0.0, %v617
    %v619 = vpop.f32.mrf.mxu0
    %620 = vmatprep.mubr.f32.mxu0 0.0
    %621 = vmatmul.mubr.f32.gmra.mxu0 %v519
    %v622 = vpop.f32.mrf.mxu0
    %v623 = vadd.f32 0.0, %v622
    %v624 = vpop.f32.mrf.mxu0
    %625 = vdwg.mxu0
    %v626 = vmul.f32 %v588, %v245
    %v627 = vmul.f32 %v593, %v246
    %v628 = vmul.f32 %v598, %v247
    %v629 = vmul.f32 %v603, %v248
    %v630 = vmul.f32 %v608, %v249
    %v631 = vmul.f32 %v613, %v250
    %v632 = vmul.f32 %v618, %v251
    %v633 = vmul.f32 %v623, %v252
    %v634 = vadd.f32 %v626, %v628
    %v635 = vadd.f32 %v627, %v629
    %v636 = vadd.f32 %v634, %v630
    %v637 = vadd.f32 %v635, %v631
    %v638 = vadd.f32 %v636, %v632
    %v639 = vadd.f32 %v637, %v633
    %v640 = vld [vmem:[%s1 + $0x60] sm:$0xff]
    %v641 = vld [vmem:[%s1 + $0x68] sm:$0xff]
    %v642 = vld [vmem:[%s1 + $0x70] sm:$0xff]
    %v643 = vld [vmem:[%s1 + $0x78] sm:$0xff]
    %v644 = vld [vmem:[%s1 + $0x141] sm:$0x1]
    %v645 = vlaneseq
    %v646 = vshrl.u32 %v645, 7
    %v647 = vsub.s32 0, %v646
    %v648 = vrot.slane %v644, %v647
    %v650 = vsel %vm37, %v638, 0
    %v653 = vsel %vm37, %v639, 0
    %v656 = vsel %vm37, %v640, 0
    %v659 = vsel %vm37, %v641, 0
    %v662 = vsel %vm37, %v642, 0
    %v665 = vsel %vm37, %v643, 0
    %667 = vmatprep.subr.mxu0 0.0
    %668 = vmatpush1.xpose.msra.mxu0 0.0
    %669 = vmatprep.subr.mxu0 0.0
    %670 = vmatpush1.xpose.msra.mxu0 0.0
    %671 = vmatprep.subr.mxu0 0.0
    %672 = vmatpush1.xpose.msra.mxu0 0.0
    %673 = vmatprep.subr.mxu0 0.0
    %674 = vmatpush1.xpose.msra.mxu0 0.0
    %675 = vmatprep.subr.mxu0 0.0
    %676 = vmatpush1.xpose.msra.mxu0 0.0
    %677 = vmatprep.subr.mxu0 0.0
    %678 = vmatpush1.xpose.msra.mxu0 0.0
    %679 = vmatprep.subr.mxu0 0.0
    %680 = vmatpush1.xpose.msra.mxu0 0.0
    %681 = vmatprep.subr.mxu0 0.0
    %682 = vmatpush1.xpose.msra.mxu0 0.0
    %683 = vmatprep.subr.mxu0 0.0
    %684 = vmatpush1.xpose.msra.mxu0 0.0
    %685 = vmatprep.subr.mxu0 0.0
    %686 = vmatpush1.xpose.msra.mxu0 0.0
    %687 = vmatprep.subr.mxu0 0.0
    %688 = vmatpush1.xpose.msra.mxu0 0.0
    %689 = vmatprep.subr.mxu0 0.0
    %690 = vmatpush1.xpose.msra.mxu0 0.0
    %691 = vmatprep.subr.mxu0 0.0
    %692 = vmatpush1.xpose.msra.mxu0 %v665
    %693 = vmatprep.subr.mxu0 0.0
    %694 = vmatpush1.xpose.msra.mxu0 %v662
    %695 = vmatprep.subr.mxu0 0.0
    %696 = vmatpush1.xpose.msra.mxu0 %v659
    %697 = vmatprep.subr.mxu0 0.0
    %698 = vmatpush1.xpose.msra.mxu0 %v656
    %699 = vmatprep.subr.mxu0 0.0
    %700 = vmatpush2.xpose.msra.mxu0 0.0
    %701 = vmatprep.subr.mxu0 0.0
    %702 = vmatpush2.xpose.msra.mxu0 0.0
    %703 = vmatprep.subr.mxu0 0.0
    %704 = vmatpush2.xpose.msra.mxu0 0.0
    %705 = vmatprep.subr.mxu0 0.0
    %706 = vmatpush2.xpose.msra.mxu0 0.0
    %707 = vmatprep.subr.mxu0 0.0
    %708 = vmatpush2.xpose.msra.mxu0 0.0
    %709 = vmatprep.subr.mxu0 0.0
    %710 = vmatpush2.xpose.msra.mxu0 0.0
    %711 = vmatprep.subr.mxu0 0.0
    %712 = vmatpush2.xpose.msra.mxu0 0.0
    %713 = vmatprep.subr.mxu0 0.0
    %714 = vmatpush2.xpose.msra.mxu0 0.0
    %715 = vmatprep.subr.mxu0 0.0
    %716 = vmatpush2.xpose.msra.mxu0 0.0
    %717 = vmatprep.subr.mxu0 0.0
    %718 = vmatpush2.xpose.msra.mxu0 0.0
    %719 = vmatprep.subr.mxu0 0.0
    %720 = vmatpush2.xpose.msra.mxu0 0.0
    %721 = vmatprep.subr.mxu0 0.0
    %722 = vmatpush2.xpose.msra.mxu0 0.0
    %723 = vmatprep.subr.mxu0 0.0
    %724 = vmatpush2.xpose.msra.mxu0 0.0
    %725 = vmatprep.subr.mxu0 0.0
    %726 = vmatpush2.xpose.msra.mxu0 0.0
    %727 = vmatprep.subr.mxu0 0.0
    %728 = vmatpush2.xpose.msra.mxu0 0.0
    %729 = vmatprep.subr.mxu0 0.0
    %730 = vmatpush2.xpose.msra.mxu0 0.0
    %731 = vmatprep.mubr.f32.mxu0 0.0
    %732 = vmatmul.mubr.f32.gmra.mxu0 %v650
    %v733 = vpop.f32.mrf.mxu0
    %v734 = vadd.f32 %v648, %v733
    %v735 = vpop.f32.mrf.mxu0
    %736 = vmatprep.mubr.f32.mxu0 0.0
    %737 = vmatmul.mubr.f32.gmra.mxu0 %v653
    %v738 = vpop.f32.mrf.mxu0
    %v739 = vadd.f32 %v648, %v738
    %v740 = vpop.f32.mrf.mxu0
    %741 = vdwg.mxu0
    %v742 = vadd.f32 %v18, %v734
    %v743 = vadd.f32 %v19, %v739
    %v744 = vld [vmem:[%s1 + $0x143] sm:$0x1]
    %v745 = vld [vmem:[%s1 + $0x144] sm:$0x1]
    %v746 = vsel %vm37, %v742, 0.0
    %747 = vadd.xlane.f32.xlu0 %v746
    %v748 = vpop.xlane.xlu0 %747
    %v749 = vsel %vm37, %v743, 0.0
    %750 = vadd.xlane.f32.xlu0 %v749
    %v751 = vpop.xlane.xlu0 %750
    %v752 = vrcp.pop 32.0
    %v753 = vmul.f32 %v748, %v752
    %v754 = vmul.f32 %v751, %v752
    %v755 = vsub.f32 %v742, %v753
    %v756 = vsub.f32 %v743, %v754
    %v757 = vmul.f32 %v755, %v755
    %v758 = vmul.f32 %v756, %v756
    %v759 = vsel %vm37, %v757, 0.0
    %760 = vadd.xlane.f32.xlu0 %v759
    %v761 = vpop.xlane.xlu0 %760
    %v762 = vsel %vm37, %v758, 0.0
    %763 = vadd.xlane.f32.xlu0 %v762
    %v764 = vpop.xlane.xlu0 %763
    %v765 = vmul.f32 %v761, %v752
    %v766 = vmul.f32 %v764, %v752
    %v767 = vadd.f32 %v765, 1e-05
    %v768 = vadd.f32 %v766, 1e-05
    %v769 = vrsqrt.pop %v767
    %v770 = vrsqrt.pop %v768
    %v771 = vmul.f32 %v755, %v769
    %v772 = vmul.f32 %v756, %v770
    %v773 = vlaneseq
    %v774 = vshrl.u32 %v773, 7
    %v775 = vsub.s32 0, %v774
    %v776 = vrot.slane %v744, %v775
    %v777 = vmul.f32 %v771, %v776
    %v778 = vmul.f32 %v772, %v776
    %v779 = vlaneseq
    %v780 = vshrl.u32 %v779, 7
    %v781 = vsub.s32 0, %v780
    %v782 = vrot.slane %v745, %v781
    %v783 = vadd.f32 %v777, %v782
    %v784 = vadd.f32 %v778, %v782
    %v785 = vld [vmem:[%s1 + $0x80] sm:$0xff]
    %v786 = vld [vmem:[%s1 + $0x88] sm:$0xff]
    %v787 = vld [vmem:[%s1 + $0x90] sm:$0xff]
    %v788 = vld [vmem:[%s1 + $0x98] sm:$0xff]
    %v789 = vld [vmem:[%s1 + $0xa0] sm:$0xff]
    %v790 = vld [vmem:[%s1 + $0xa8] sm:$0xff]
    %v791 = vld [vmem:[%s1 + $0xb0] sm:$0xff]
    %v792 = vld [vmem:[%s1 + $0xb8] sm:$0xff]
    %v793 = vlaneseq
    %v794 = vshrl.u32 %v793, 7
    %v795 = vsub.s32 1, %v794
    %v796 = vrot.slane %v24, %v795
    %v798 = vsel %vm37, %v783, 0
    %v801 = vsel %vm37, %v784, 0
    %v804 = vsel %vm37, %v785, 0
    %v807 = vsel %vm37, %v786, 0
    %v810 = vsel %vm37, %v787, 0
    %v813 = vsel %vm37, %v788, 0
    %v816 = vsel %vm37, %v789, 0
    %v819 = vsel %vm37, %v790, 0
    %v822 = vsel %vm37, %v791, 0
    %v825 = vsel %vm37, %v792, 0
    %827 = vmatprep.subr.mxu0 0.0
    %828 = vmatpush1.xpose.msra.mxu0 0.0
    %829 = vmatprep.subr.mxu0 0.0
    %830 = vmatpush1.xpose.msra.mxu0 0.0
    %831 = vmatprep.subr.mxu0 0.0
    %832 = vmatpush1.xpose.msra.mxu0 0.0
    %833 = vmatprep.subr.mxu0 0.0
    %834 = vmatpush1.xpose.msra.mxu0 0.0
    %835 = vmatprep.subr.mxu0 0.0
    %836 = vmatpush1.xpose.msra.mxu0 0.0
    %837 = vmatprep.subr.mxu0 0.0
    %838 = vmatpush1.xpose.msra.mxu0 0.0
    %839 = vmatprep.subr.mxu0 0.0
    %840 = vmatpush1.xpose.msra.mxu0 0.0
    %841 = vmatprep.subr.mxu0 0.0
    %842 = vmatpush1.xpose.msra.mxu0 0.0
    %843 = vmatprep.subr.mxu0 0.0
    %844 = vmatpush1.xpose.msra.mxu0 %v825
    %845 = vmatprep.subr.mxu0 0.0
    %846 = vmatpush1.xpose.msra.mxu0 %v822
    %847 = vmatprep.subr.mxu0 0.0
    %848 = vmatpush1.xpose.msra.mxu0 %v819
    %849 = vmatprep.subr.mxu0 0.0
    %850 = vmatpush1.xpose.msra.mxu0 %v816
    %851 = vmatprep.subr.mxu0 0.0
    %852 = vmatpush1.xpose.msra.mxu0 %v813
    %853 = vmatprep.subr.mxu0 0.0
    %854 = vmatpush1.xpose.msra.mxu0 %v810
    %855 = vmatprep.subr.mxu0 0.0
    %856 = vmatpush1.xpose.msra.mxu0 %v807
    %857 = vmatprep.subr.mxu0 0.0
    %858 = vmatpush1.xpose.msra.mxu0 %v804
    %859 = vmatprep.subr.mxu0 0.0
    %860 = vmatpush2.xpose.msra.mxu0 0.0
    %861 = vmatprep.subr.mxu0 0.0
    %862 = vmatpush2.xpose.msra.mxu0 0.0
    %863 = vmatprep.subr.mxu0 0.0
    %864 = vmatpush2.xpose.msra.mxu0 0.0
    %865 = vmatprep.subr.mxu0 0.0
    %866 = vmatpush2.xpose.msra.mxu0 0.0
    %867 = vmatprep.subr.mxu0 0.0
    %868 = vmatpush2.xpose.msra.mxu0 0.0
    %869 = vmatprep.subr.mxu0 0.0
    %870 = vmatpush2.xpose.msra.mxu0 0.0
    %871 = vmatprep.subr.mxu0 0.0
    %872 = vmatpush2.xpose.msra.mxu0 0.0
    %873 = vmatprep.subr.mxu0 0.0
    %874 = vmatpush2.xpose.msra.mxu0 0.0
    %875 = vmatprep.subr.mxu0 0.0
    %876 = vmatpush2.xpose.msra.mxu0 0.0
    %877 = vmatprep.subr.mxu0 0.0
    %878 = vmatpush2.xpose.msra.mxu0 0.0
    %879 = vmatprep.subr.mxu0 0.0
    %880 = vmatpush2.xpose.msra.mxu0 0.0
    %881 = vmatprep.subr.mxu0 0.0
    %882 = vmatpush2.xpose.msra.mxu0 0.0
    %883 = vmatprep.subr.mxu0 0.0
    %884 = vmatpush2.xpose.msra.mxu0 0.0
    %885 = vmatprep.subr.mxu0 0.0
    %886 = vmatpush2.xpose.msra.mxu0 0.0
    %887 = vmatprep.subr.mxu0 0.0
    %888 = vmatpush2.xpose.msra.mxu0 0.0
    %889 = vmatprep.subr.mxu0 0.0
    %890 = vmatpush2.xpose.msra.mxu0 0.0
    %891 = vmatprep.mubr.f32.mxu0 0.0
    %892 = vmatmul.mubr.f32.gmra.mxu0 %v798
    %v893 = vpop.f32.mrf.mxu0
    %v894 = vadd.f32 %v796, %v893
    %v895 = vpop.f32.mrf.mxu0
    %896 = vmatprep.mubr.f32.mxu0 0.0
    %897 = vmatmul.mubr.f32.gmra.mxu0 %v801
    %v898 = vpop.f32.mrf.mxu0
    %v899 = vadd.f32 %v796, %v898
    %v900 = vpop.f32.mrf.mxu0
    %901 = vdwg.mxu0
    %v902 = vmax.f32 %v894, 0.0
    %v903 = vmax.f32 %v899, 0.0
    %v904 = vld [vmem:[%s1 + $0xc0] sm:$0xff]
    %v905 = vld [vmem:[%s1 + $0xc8] sm:$0xff]
    %v906 = vld [vmem:[%s1 + $0xd0] sm:$0xff]
    %v907 = vld [vmem:[%s1 + $0xd8] sm:$0xff]
    %v908 = vld [vmem:[%s1 + $0xe0] sm:$0xff]
    %v909 = vld [vmem:[%s1 + $0xe8] sm:$0xff]
    %v910 = vld [vmem:[%s1 + $0xf0] sm:$0xff]
    %v911 = vld [vmem:[%s1 + $0xf8] sm:$0xff]
    %v912 = vld [vmem:[%s1 + $0x142] sm:$0x1]
    %v913 = vlaneseq
    %v914 = vshrl.u32 %v913, 7
    %v915 = vsub.s32 0, %v914
    %v916 = vrot.slane %v912, %v915
    %vm917 = vcmask 523264
    %v919 = vsel %vm917, %v902, 0
    %v922 = vsel %vm917, %v903, 0
    %924 = vmatprep.subr.mxu0 0.0
    %925 = vmatpush1.msra.mxu0 0.0
    %926 = vmatprep.subr.mxu0 0.0
    %927 = vmatpush1.msra.mxu0 0.0
    %928 = vmatprep.subr.mxu0 0.0
    %929 = vmatpush1.msra.mxu0 0.0
    %930 = vmatprep.subr.mxu0 0.0
    %931 = vmatpush1.msra.mxu0 0.0
    %932 = vmatprep.subr.mxu0 0.0
    %933 = vmatpush1.msra.mxu0 0.0
    %934 = vmatprep.subr.mxu0 0.0
    %935 = vmatpush1.msra.mxu0 0.0
    %936 = vmatprep.subr.mxu0 0.0
    %937 = vmatpush1.msra.mxu0 0.0
    %938 = vmatprep.subr.mxu0 0.0
    %939 = vmatpush1.msra.mxu0 0.0
    %940 = vmatprep.subr.mxu0 0.0
    %941 = vmatpush1.msra.mxu0 %v911
    %942 = vmatprep.subr.mxu0 0.0
    %943 = vmatpush1.msra.mxu0 %v910
    %944 = vmatprep.subr.mxu0 0.0
    %945 = vmatpush1.msra.mxu0 %v909
    %946 = vmatprep.subr.mxu0 0.0
    %947 = vmatpush1.msra.mxu0 %v908
    %948 = vmatprep.subr.mxu0 0.0
    %949 = vmatpush1.msra.mxu0 %v907
    %950 = vmatprep.subr.mxu0 0.0
    %951 = vmatpush1.msra.mxu0 %v906
    %952 = vmatprep.subr.mxu0 0.0
    %953 = vmatpush1.msra.mxu0 %v905
    %954 = vmatprep.subr.mxu0 0.0
    %955 = vmatpush1.msra.mxu0 %v904
    %956 = vmatprep.subr.mxu0 0.0
    %957 = vmatpush2.msra.mxu0 0.0
    %958 = vmatprep.subr.mxu0 0.0
    %959 = vmatpush2.msra.mxu0 0.0
    %960 = vmatprep.subr.mxu0 0.0
    %961 = vmatpush2.msra.mxu0 0.0
    %962 = vmatprep.subr.mxu0 0.0
    %963 = vmatpush2.msra.mxu0 0.0
    %964 = vmatprep.subr.mxu0 0.0
    %965 = vmatpush2.msra.mxu0 0.0
    %966 = vmatprep.subr.mxu0 0.0
    %967 = vmatpush2.msra.mxu0 0.0
    %968 = vmatprep.subr.mxu0 0.0
    %969 = vmatpush2.msra.mxu0 0.0
    %970 = vmatprep.subr.mxu0 0.0
    %971 = vmatpush2.msra.mxu0 0.0
    %972 = vmatprep.subr.mxu0 0.0
    %973 = vmatpush2.msra.mxu0 0.0
    %974 = vmatprep.subr.mxu0 0.0
    %975 = vmatpush2.msra.mxu0 0.0
    %976 = vmatprep.subr.mxu0 0.0
    %977 = vmatpush2.msra.mxu0 0.0
    %978 = vmatprep.subr.mxu0 0.0
    %979 = vmatpush2.msra.mxu0 0.0
    %980 = vmatprep.subr.mxu0 0.0
    %981 = vmatpush2.msra.mxu0 0.0
    %982 = vmatprep.subr.mxu0 0.0
    %983 = vmatpush2.msra.mxu0 0.0
    %984 = vmatprep.subr.mxu0 0.0
    %985 = vmatpush2.msra.mxu0 0.0
    %986 = vmatprep.subr.mxu0 0.0
    %987 = vmatpush2.msra.mxu0 0.0
    %988 = vmatprep.mubr.f32.mxu0 0.0
    %989 = vmatmul.mubr.f32.gmra.mxu0 %v919
    %v990 = vpop.f32.mrf.mxu0
    %v991 = vadd.f32 %v916, %v990
    %v992 = vpop.f32.mrf.mxu0
    %993 = vmatprep.mubr.f32.mxu0 0.0
    %994 = vmatmul.mubr.f32.gmra.mxu0 %v922
    %v995 = vpop.f32.mrf.mxu0
    %v996 = vadd.f32 %v916, %v995
    %v997 = vpop.f32.mrf.mxu0
    %998 = vdwg.mxu0
    %v999 = vadd.f32 %v783, %v991
    %v1000 = vadd.f32 %v784, %v996
    %v1001 = vld [vmem:[%s1 + $0x145] sm:$0x1]
    %v1002 = vld [vmem:[%s1 + $0x146] sm:$0x1]
    %v1003 = vsel %vm37, %v999, 0.0
    %1004 = vadd.xlane.f32.xlu0 %v1003
    %v1005 = vpop.xlane.xlu0 %1004
    %v1006 = vsel %vm37, %v1000, 0.0
    %1007 = vadd.xlane.f32.xlu0 %v1006
    %v1008 = vpop.xlane.xlu0 %1007
    %v1009 = vmul.f32 %v1005, %v752
    %v1010 = vmul.f32 %v1008, %v752
    %v1011 = vsub.f32 %v999, %v1009
    %v1012 = vsub.f32 %v1000, %v1010
    %v1013 = vmul.f32 %v1011, %v1011
    %v1014 = vmul.f32 %v1012, %v1012
    %v1015 = vsel %vm37, %v1013, 0.0
    %1016 = vadd.xlane.f32.xlu0 %v1015
    %v1017 = vpop.xlane.xlu0 %1016
    %v1018 = vsel %vm37, %v1014, 0.0
    %1019 = vadd.xlane.f32.xlu0 %v1018
    %v1020 = vpop.xlane.xlu0 %1019
    %v1021 = vmul.f32 %v1017, %v752
    %v1022 = vmul.f32 %v1020, %v752
    %v1023 = vadd.f32 %v1021, 1e-05
    %v1024 = vadd.f32 %v1022, 1e-05
    %v1025 = vrsqrt.pop %v1023
    %v1026 = vrsqrt.pop %v1024
    %v1027 = vmul.f32 %v1011, %v1025
    %v1028 = vmul.f32 %v1012, %v1026
    %v1029 = vlaneseq
    %v1030 = vshrl.u32 %v1029, 7
    %v1031 = vsub.s32 0, %v1030
    %v1032 = vrot.slane %v1001, %v1031
    %v1033 = vmul.f32 %v1027, %v1032
    %v1034 = vmul.f32 %v1028, %v1032
    %v1035 = vlaneseq
    %v1036 = vshrl.u32 %v1035, 7
    %v1037 = vsub.s32 0, %v1036
    %v1038 = vrot.slane %v1002, %v1037
    %v1039 = vadd.f32 %v1033, %v1038
    %v1040 = vadd.f32 %v1034, %v1038
    %1041 = vst.msk [vmem:[#allocation2] sm:$0xff] %vm37, %v1039
    %1042 = vst.msk [vmem:[#allocation2 + $0x8] sm:$0xff] %vm37, %v1040
    // Predicated region
    $region18: #{transformer_layer.1} parent=1 // pred_check
      _
    $region19: #{transformer_layer.1} parent=1 // pred_check_branch
      %1044 = sbr.rel (0) target = $region21
    $region20: #{transformer_layer.1} parent=1 // pred_region
      %s1046 = ssub.s32 256, 256
      %1047 = vsyncadd [#allocation3], %s1046
      %s1048 = sshll.u32 [#allocation2], 4
      %s1049 = int_to_ptr.vmem [resolvable:$true] %s1048
      %1054 = dma.vmem_to_hbm [thread:$0]  %s1049, 256, %s4, [#allocation3], 128, 128, 8
    $region21: #{transformer_layer.1} parent=1 // pred_fallthru
      _
    // Predicated region
    $region22: #{transformer_layer.1} parent=1 // pred_check
      _
    $region23: #{transformer_layer.1} parent=1 // pred_check_branch
      %1056 = sbr.rel (0) target = $region25
    $region24: #{transformer_layer.1} parent=1 // pred_region
      %1057 = dma.done [#allocation3], 256
    $region25: #{transformer_layer.1} parent=1 // pred_fallthru
      _
    %1058 = vsyncpa [#allocation3], 1

</llo_original>
